<compile_context>
chip_gen: v7x
topology: tpu7x:2x2x1
jax: 0.10.0
libtpu: 0.0.40
codegen_flags: <defaults>
</compile_context>

<pallas_src>
import functools

import jax
import jax.numpy as jnp
from jax.experimental import pallas as pl
from jax.experimental.pallas import tpu as pltpu


def _round_up(n, m):
    return ((n + m - 1) // m) * m


def _pick_col_tile(D, weight_budget_bytes):
    """Output-column tile.

    tn == D keeps W's block index constant across the whole grid, so the weight is
    DMA'd from HBM exactly once per kernel call (no re-streaming per row tile).
    Otherwise pick the largest divisor of D that is a multiple of 256 (MXU width on
    v6e/v7x; 128 fallback) whose double-buffered bf16 column block fits the budget.
    """
    if D % 128 != 0 or 2 * D * D * 2 <= weight_budget_bytes:
        return D
    cands = [t for t in range(D - 128, 0, -128)
             if D % t == 0 and 2 * D * t * 2 <= weight_budget_bytes]
    if not cands:
        return 128
    for t in cands:                  # cands is descending; prefer 256-multiples
        if t % 256 == 0:
            return t
    return cands[0]


def _sublayer_connection_kernel(x_ref, w_ref, bw_ref, a_ref, b_ref, *rest,
                                eps, features, tn, has_dropout):
    # x_ref : (tm, D)  full-feature rows (LayerNorm stats + residual source)
    # w_ref : (D, tn)  bf16 sublayer weight column tile
    # bw_ref: (1, tn)  sublayer bias column tile
    # a_ref/b_ref: (1, D) LayerNorm scale / shift
    # rest  : [drop_ref (tm, tn)] , o_ref (tm, tn), normed_scratch (tm, D) bf16
    if has_dropout:
        drop_ref, o_ref, normed_ref = rest
    else:
        o_ref, normed_ref = rest
        drop_ref = None

    j = pl.program_id(1)

    # LayerNorm once per row tile (column axis is the inner, "arbitrary" axis);
    # result cached in bf16 VMEM scratch, reused for every output-column tile.
    @pl.when(j == 0)
    def _():
        x = x_ref[...].astype(jnp.float32)
        mean = jnp.mean(x, axis=-1, keepdims=True)
        diff = x - mean
        var_unbiased = jnp.sum(diff * diff, axis=-1, keepdims=True) * (1.0 / (features - 1))
        std = jnp.sqrt(var_unbiased)                       # torch.std: unbiased
        normed = a_ref[...] * (diff / (std + eps)) + b_ref[...]
        normed_ref[...] = normed.astype(jnp.bfloat16)

    # Sublayer: linear projection D -> tn (bf16 MXU inputs, f32 accumulation).
    y = jnp.dot(normed_ref[...], w_ref[...],
                preferred_element_type=jnp.float32) + bw_ref[...]

    # Dropout: precomputed keep/(1-p) scale (host-side jax.random; see wrapper).
    if has_dropout:
        y = y * drop_ref[...]

    # Residual: slice the matching columns from the already-resident x tile
    # (x's block index is constant across j, so there is no extra HBM traffic).
    col = pl.multiple_of(j * tn, tn)
    x_res = x_ref[:, pl.ds(col, tn)].astype(jnp.float32)
    o_ref[...] = (x_res + y).astype(o_ref.dtype)


def _dropout_scale(key, rate, shape):
    keep = jax.random.bernoulli(key, 1.0 - rate, shape)
    return keep.astype(jnp.float32) * (1.0 / (1.0 - rate))


def sublayer_connection(x, a_2, b_2, w, bw, *, eps=1e-6, dropout_rate=0.0,
                        training=False, dropout_key=None,
                        block_rows=256, weight_budget_bytes=24 * 1024 * 1024):
    """Fused  out = x + dropout(Linear(LayerNorm(x))).

    x: (B, S, D).  a_2, b_2, bw: (D,).  w: (D, D).
    """
    B, S, D = x.shape
    rows = B * S

    # Row tile: multiple of 8, MXU/pipeline friendly, clamped for tiny inputs.
    tm = min(block_rows, _round_up(rows, 8))
    rows_p = _round_up(rows, tm)

    tn = _pick_col_tile(D, weight_budget_bytes)
    n_row, n_col = rows_p // tm, D // tn

    x2 = x.reshape(rows, D)
    if rows_p != rows:
        # Zero rows keep LayerNorm finite (diff == 0); padded rows are dropped below.
        x2 = jnp.pad(x2, ((0, rows_p - rows), (0, 0)))

    a2 = a_2.reshape(1, D).astype(jnp.float32)
    b2 = b_2.reshape(1, D).astype(jnp.float32)
    w2 = w.astype(jnp.bfloat16)       # bf16 weights: full MXU rate, half HBM/VMEM traffic
    bw2 = bw.reshape(1, D).astype(jnp.float32)

    has_dropout = bool(training) and dropout_rate > 0.0
    inputs = [x2, w2, bw2, a2, b2]
    in_specs = [
        pl.BlockSpec((tm, D), lambda i, j: (i, 0)),     # x rows (LN stats + residual)
        pl.BlockSpec((D, tn), lambda i, j: (0, j)),     # sublayer weight column tile
        pl.BlockSpec((1, tn), lambda i, j: (0, j)),     # sublayer bias tile
        pl.BlockSpec((1, D), lambda i, j: (0, 0)),      # layernorm a_2
        pl.BlockSpec((1, D), lambda i, j: (0, 0)),      # layernorm b_2
    ]
    if has_dropout:
        if dropout_key is None:
            raise ValueError("training-mode dropout requires dropout_key")
        # TODO(synk): torch.nn.Dropout's exact RNG stream has no Pallas equivalent;
        # the mask is generated host-side with jax.random (tiling-independent, works
        # under interpret mode — pltpu.prng_* has no CPU lowering).
        drop2 = _dropout_scale(dropout_key, float(dropout_rate), (rows_p, D))
        inputs.append(drop2)
        in_specs.append(pl.BlockSpec((tm, tn), lambda i, j: (i, j)))

    kernel = functools.partial(
        _sublayer_connection_kernel,
        eps=eps, features=D, tn=tn, has_dropout=has_dropout)

    # VMEM estimate: x (2 bufs f32) + W (2 bufs bf16) + out (2 bufs f32)
    # + bf16 normed scratch (+ dropout scale) + params.  48 MiB floor is safe on
    # v5e/v6e/v7x; grows (toward v6e/v5e's 128 MiB) only when the tiles need it.
    est = (2 * tm * D * 4 + 2 * D * tn * 2 + 2 * tm * tn * 4 + tm * D * 2
           + (2 * tm * tn * 4 if has_dropout else 0) + 8 * D * 4)
    vmem_limit = min(100 * 1024 * 1024, max(48 * 1024 * 1024, int(est * 1.4)))

    out = pl.pallas_call(
        kernel,
        out_shape=jax.ShapeDtypeStruct((rows_p, D), x.dtype),
        grid_spec=pltpu.PrefetchScalarGridSpec(
            num_scalar_prefetch=0,
            grid=(n_row, n_col),
            in_specs=in_specs,
            out_specs=pl.BlockSpec((tm, tn), lambda i, j: (i, j)),
            scratch_shapes=[pltpu.VMEM((tm, D), jnp.bfloat16)],   # cached LN output
        ),
        compiler_params=pltpu.CompilerParams(
            # Rows independent (megacore-shardable on v7x); columns sequential
            # ("arbitrary", inner axis) so the LayerNorm scratch is reused.
            dimension_semantics=("parallel", "arbitrary"),
            vmem_limit_bytes=vmem_limit),
    )(*inputs)

    if rows_p != rows:
        out = out[:rows]
    return out.reshape(B, S, D)


def _reference(x, a_2, b_2, w, bw, eps=1e-6, drop_scale=None):
    # Pure-JAX reference mirroring the PyTorch forward.  Matmul inputs are cast to
    # bf16 to match the kernel's MXU precision; LayerNorm stays in f32 like the kernel.
    x32 = x.astype(jnp.float32)
    mean = jnp.mean(x32, axis=-1, keepdims=True)
    std = jnp.std(x32, axis=-1, keepdims=True, ddof=1)    # torch.std is unbiased
    normed = a_2 * (x32 - mean) / (std + eps) + b_2
    y = jnp.einsum("bsd,de->bse", normed.astype(jnp.bfloat16),
                   w.astype(jnp.bfloat16),
                   preferred_element_type=jnp.float32) + bw
    if drop_scale is not None:
        y = y * drop_scale.reshape(x.shape)
    return x32 + y


if __name__ == "__main__":
    B, S, D = 2, 8, 128   # batch=2, seq=8, hidden=128 (lane-dense last dim)

    key = jax.random.PRNGKey(0)
    kx, kw, kb, kd = jax.random.split(key, 4)

    x = jax.random.normal(kx, (B, S, D), dtype=jnp.float32)

    # LayerNorm params: as in __init__ (ones / zeros).
    a_2 = jnp.ones((D,), jnp.float32)
    b_2 = jnp.zeros((D,), jnp.float32)
    # Deterministic sublayer (linear) params.
    w = jax.random.normal(kw, (D, D), dtype=jnp.float32) * 0.1
    bw = jax.random.normal(kb, (D,), dtype=jnp.float32) * 0.1

    # Eval mode (dropout == identity).
    out = sublayer_connection(x, a_2, b_2, w, bw, dropout_rate=0.1, training=False)
    out = jax.block_until_ready(out)
    ref = _reference(x, a_2, b_2, w, bw)
    assert jnp.allclose(out, ref, atol=2e-2, rtol=2e-2), "eval-mode mismatch vs reference"

    # Training mode: the dropout keep-scale comes from jax.random with a known key,
    # so the fused kernel can be checked exactly against the same-masked reference.
    rows = B * S                      # no row padding at this size (rows == rows_p)
    scale = _dropout_scale(kd, 0.1, (rows, D))
    out_tr = sublayer_connection(x, a_2, b_2, w, bw, dropout_rate=0.1,
                                 training=True, dropout_key=kd)
    out_tr = jax.block_until_ready(out_tr)
    ref_tr = _reference(x, a_2, b_2, w, bw, drop_scale=scale)
    assert jnp.allclose(out_tr, ref_tr, atol=2e-2, rtol=2e-2), "training-mode mismatch"
    assert bool(jnp.all(jnp.isfinite(out_tr))), "training path produced non-finite values"

    print("KERNEL_OK")
</pallas_src>

<mosaic_0001>
module attributes {stable_mosaic.version = 11 : i64} {
  func.func @_sublayer_connection_kernel(%arg0: i32, %arg1: i32, %arg2: memref<16x128xf32, #tpu.memory_space<vmem>>, %arg3: memref<128x128xbf16, #tpu.memory_space<vmem>>, %arg4: memref<1x128xf32, #tpu.memory_space<vmem>>, %arg5: memref<1x128xf32, #tpu.memory_space<vmem>>, %arg6: memref<1x128xf32, #tpu.memory_space<vmem>>, %arg7: memref<16x128xf32, #tpu.memory_space<vmem>>, %arg8: memref<16x128xbf16, #tpu.memory_space<vmem>>) attributes {dimension_semantics = [#tpu.dimension_semantics<parallel>, #tpu.dimension_semantics<arbitrary>], iteration_bounds = array<i64: 1, 1>, scalar_prefetch = 0 : i64, scratch_operands = 1 : i64, tpu.core_type = #tpu.core_type<tc>, window_params = [{transform_indices = @transform_0, window_bounds = array<i64: 16, 128>}, {transform_indices = @transform_1, window_bounds = array<i64: 128, 128>}, {transform_indices = @transform_2, window_bounds = array<i64: 1, 128>}, {pipeline_mode = #tpu.pipeline_mode<synchronous>, transform_indices = @transform_3, window_bounds = array<i64: 1, 128>}, {pipeline_mode = #tpu.pipeline_mode<synchronous>, transform_indices = @transform_4, window_bounds = array<i64: 1, 128>}, {transform_indices = @transform_5, window_bounds = array<i64: 16, 128>}]} {
    %c0_i32 = arith.constant 0 : i32
    %0 = arith.cmpi eq, %arg1, %c0_i32 : i32
    %1 = arith.extui %0 : i1 to i32
    %c0_i32_0 = arith.constant 0 : i32
    %2 = arith.cmpi ne, %1, %c0_i32_0 : i32
    scf.if %2 {
      %c0_9 = arith.constant 0 : index
      %c0_10 = arith.constant 0 : index
      %15 = vector.load %arg2[%c0_9, %c0_10] : memref<16x128xf32, #tpu.memory_space<vmem>>, vector<16x128xf32>
      %cst_11 = arith.constant dense<0.000000e+00> : vector<16xf32>
      %16 = vector.multi_reduction <add>, %15, %cst_11 [1] : vector<16x128xf32> to vector<16xf32>
      %17 = vector.shape_cast %16 : vector<16xf32> to vector<16x1xf32>
      %cst_12 = arith.constant 1.280000e+02 : f32
      %18 = vector.broadcast %cst_12 : f32 to vector<16x1xf32>
      %19 = arith.divf %17, %18 : vector<16x1xf32>
      %20 = vector.broadcast %19 : vector<16x1xf32> to vector<16x128xf32>
      %21 = arith.subf %15, %20 : vector<16x128xf32>
      %22 = arith.mulf %21, %21 : vector<16x128xf32>
      %cst_13 = arith.constant dense<0.000000e+00> : vector<16xf32>
      %23 = vector.multi_reduction <add>, %22, %cst_13 [1] : vector<16x128xf32> to vector<16xf32>
      %24 = vector.shape_cast %23 : vector<16xf32> to vector<16x1xf32>
      %cst_14 = arith.constant 0.00787401571 : f32
      %25 = vector.broadcast %cst_14 : f32 to vector<16x1xf32>
      %26 = arith.mulf %24, %25 : vector<16x1xf32>
      %27 = math.sqrt %26 : vector<16x1xf32>
      %c0_15 = arith.constant 0 : index
      %c0_16 = arith.constant 0 : index
      %28 = vector.load %arg5[%c0_15, %c0_16] : memref<1x128xf32, #tpu.memory_space<vmem>>, vector<1x128xf32>
      %cst_17 = arith.constant 9.99999997E-7 : f32
      %29 = vector.broadcast %cst_17 : f32 to vector<16x1xf32>
      %30 = arith.addf %27, %29 : vector<16x1xf32>
      %31 = vector.broadcast %30 : vector<16x1xf32> to vector<16x128xf32>
      %32 = arith.divf %21, %31 : vector<16x128xf32>
      %33 = vector.broadcast %28 : vector<1x128xf32> to vector<16x128xf32>
      %34 = arith.mulf %33, %32 : vector<16x128xf32>
      %c0_18 = arith.constant 0 : index
      %c0_19 = arith.constant 0 : index
      %35 = vector.load %arg6[%c0_18, %c0_19] : memref<1x128xf32, #tpu.memory_space<vmem>>, vector<1x128xf32>
      %36 = vector.broadcast %35 : vector<1x128xf32> to vector<16x128xf32>
      %37 = arith.addf %34, %36 : vector<16x128xf32>
      %38 = arith.truncf %37 : vector<16x128xf32> to vector<16x128xbf16>
      %c0_20 = arith.constant 0 : index
      %c0_21 = arith.constant 0 : index
      %39 = vector.load %arg8[%c0_20, %c0_21] : memref<16x128xbf16, #tpu.memory_space<vmem>>, vector<16x128xbf16>
      tpu.vector_store %arg8[%c0_20, %c0_21], %38 {strides = array<i32>} : memref<16x128xbf16, #tpu.memory_space<vmem>>, vector<16x128xbf16>,
    } else {
    }
    %c0 = arith.constant 0 : index
    %c0_1 = arith.constant 0 : index
    %3 = vector.load %arg8[%c0, %c0_1] : memref<16x128xbf16, #tpu.memory_space<vmem>>, vector<16x128xbf16>
    %c0_2 = arith.constant 0 : index
    %c0_3 = arith.constant 0 : index
    %4 = vector.load %arg3[%c0_2, %c0_3] : memref<128x128xbf16, #tpu.memory_space<vmem>>, vector<128x128xbf16>
    %cst = arith.constant dense<0.000000e+00> : vector<16x128xf32>
    %5 = tpu.matmul %3, %4, %cst {dimension_numbers = #tpu.dot_dimension_numbers<[1], [0], [0], [1], [0, 0, 1, 1], [], []>} : vector<16x128xbf16>, vector<128x128xbf16>, vector<16x128xf32> -> vector<16x128xf32>
    %c0_4 = arith.constant 0 : index
    %c0_5 = arith.constant 0 : index
    %6 = vector.load %arg4[%c0_4, %c0_5] : memref<1x128xf32, #tpu.memory_space<vmem>>, vector<1x128xf32>
    %7 = vector.broadcast %6 : vector<1x128xf32> to vector<16x128xf32>
    %8 = arith.addf %5, %7 : vector<16x128xf32>
    %c128_i32 = arith.constant 128 : i32
    %9 = arith.muli %arg1, %c128_i32 : i32
    %10 = tpu.assume_multiple %9, 128 : i32
    %c0_6 = arith.constant 0 : index
    %11 = arith.index_cast %10 : i32 to index
    %12 = vector.load %arg2[%c0_6, %11] : memref<16x128xf32, #tpu.memory_space<vmem>>, vector<16x128xf32>
    %13 = arith.addf %12, %8 : vector<16x128xf32>
    %c0_7 = arith.constant 0 : index
    %c0_8 = arith.constant 0 : index
    %14 = vector.load %arg7[%c0_7, %c0_8] : memref<16x128xf32, #tpu.memory_space<vmem>>, vector<16x128xf32>
    tpu.vector_store %arg7[%c0_7, %c0_8], %13 {strides = array<i32>} : memref<16x128xf32, #tpu.memory_space<vmem>>, vector<16x128xf32>,
    return
  }
  func.func @transform_0(%arg0: i32, %arg1: i32) -> (i32, i32) {
    %c0_i32 = arith.constant 0 : i32
    %c0_i32_0 = arith.constant 0 : i32
    return %arg0, %c0_i32 : i32, i32
  }
  func.func @transform_1(%arg0: i32, %arg1: i32) -> (i32, i32) {
    %c0_i32 = arith.constant 0 : i32
    %c0_i32_0 = arith.constant 0 : i32
    return %c0_i32, %arg1 : i32, i32
  }
  func.func @transform_2(%arg0: i32, %arg1: i32) -> (i32, i32) {
    %c0_i32 = arith.constant 0 : i32
    %c0_i32_0 = arith.constant 0 : i32
    return %c0_i32, %arg1 : i32, i32
  }
  func.func @transform_3(%arg0: i32, %arg1: i32) -> (i32, i32) {
    %c0_i32 = arith.constant 0 : i32
    %c0_i32_0 = arith.constant 0 : i32
    %c0_i32_1 = arith.constant 0 : i32
    return %c0_i32, %c0_i32_0 : i32, i32
  }
  func.func @transform_4(%arg0: i32, %arg1: i32) -> (i32, i32) {
    %c0_i32 = arith.constant 0 : i32
    %c0_i32_0 = arith.constant 0 : i32
    %c0_i32_1 = arith.constant 0 : i32
    return %c0_i32, %c0_i32_0 : i32, i32
  }
  func.func @transform_5(%arg0: i32, %arg1: i32) -> (i32, i32) {
    %c0_i32 = arith.constant 0 : i32
    return %arg0, %arg1 : i32, i32
  }
}

</mosaic_0001>

<llo_original>
// kernel: tpu_custom_call.1
$region0: #{tpu_custom_call.1}
  #allocation0 [shape = 'u32[]', space=smem, size = 0x4, offset = 0x4, fixed_abs, tag = 'smem constant byte address 0x4 - core index']
  #allocation1 [shape = 'u32[144,128]{1,0:T(1,128)}', space=vmem, size = 0x12000, scoped, tag = 'internal scratch']
  #allocation2 [shape = 'bf16[16,128]{1,0:T(16,128)(2,1)}', space=vmem, size = 0x1000, scoped, tag = 'scratch operand']
  %s0 = inlined_call_operand.hbm [shape: f32[16,128], index: 0, kind: input, shape index: {}]
  %s1 = inlined_call_operand.hbm [shape: bf16[128,128], index: 1, kind: input, shape index: {}]
  %s2 = inlined_call_operand.vmem [shape: f32[1,128], index: 2, kind: input, shape index: {}]
  %s3 = inlined_call_operand.vmem [shape: f32[1,128], index: 3, kind: input, shape index: {}]
  %s4 = inlined_call_operand.vmem [shape: f32[1,128], index: 4, kind: input, shape index: {}]
  %s5 = inlined_call_operand.hbm [shape: f32[16,128], index: 5, kind: output, shape index: {}]
  %s6 = sld [smem:[#allocation0]]
  $region42: #{tpu_custom_call.1} parent=0
    _
  %s8 = ssub.s32 1, %s6
  %s9 = scalar_select 0, %s8, %s6
  $region1: #{tpu_custom_call.1} parent=0
    #allocation3 [shape = 'u8[8192]{0}', space=vmem, size = 0x2000, scoped, tag = 'input window, operand 0, single buffered']
    #allocation4 [shape = 's32[1]{0}', space=sflag, size = 0x4, scoped, tag = 'scoped memory for tpu_custom_call.1']
    #allocation5 [shape = 's32[1]{0}', space=sflag, size = 0x4, scoped, tag = 'scoped memory for tpu_custom_call.1']
    #allocation6 [shape = 'u8[32768]{0}', space=vmem, size = 0x8000, scoped, tag = 'input window, operand 1, single buffered']
    #allocation7 [shape = 's32[1]{0}', space=sflag, size = 0x4, scoped, tag = 'scoped memory for tpu_custom_call.1']
    #allocation8 [shape = 'u8[8192]{0}', space=vmem, size = 0x2000, scoped, tag = 'output window, operand 0, single buffered']
    %10 = vsyncpa [#allocation4], 0
    %11 = vsyncpa [#allocation7], 0
    %12 = vsyncpa [#allocation5], 0
    // Predicated region
    $region2: #{tpu_custom_call.1} parent=1 // pred_check
      _
    $region3: #{tpu_custom_call.1} parent=1 // pred_check_branch
      %14 = sbr.rel (0) target = $region5
    $region4: #{tpu_custom_call.1} parent=1 // pred_region
      %s16 = ssub.s32 256, 256
      %17 = vsyncadd [#allocation4], %s16
      %s18 = sshll.u32 [#allocation3], 4
      %s19 = int_to_ptr.vmem [resolvable:$true] %s18
      %24 = dma.hbm_to_vmem [thread:$0]  %s0, 256, %s19, [#allocation4], 128, 128, 8
    $region5: #{tpu_custom_call.1} parent=1 // pred_fallthru
      _
    // Predicated region
    $region6: #{tpu_custom_call.1} parent=1 // pred_check
      _
    $region7: #{tpu_custom_call.1} parent=1 // pred_check_branch
      %26 = sbr.rel (0) target = $region9
    $region8: #{tpu_custom_call.1} parent=1 // pred_region
      %s28 = ssub.s32 1024, 1024
      %29 = vsyncadd [#allocation7], %s28
      %s30 = sshll.u32 [#allocation6], 4
      %s31 = int_to_ptr.vmem [resolvable:$true] %s30
      %36 = dma.hbm_to_vmem [thread:$0]  %s1, 1024, %s31, [#allocation7], 64, 64, 4
    $region9: #{tpu_custom_call.1} parent=1 // pred_fallthru
      _
    // Predicated region
    $region10: #{tpu_custom_call.1} parent=1 // pred_check
      _
    $region11: #{tpu_custom_call.1} parent=1 // pred_check_branch
      %38 = sbr.rel (0) target = $region13
    $region12: #{tpu_custom_call.1} parent=1 // pred_region
      _
    $region13: #{tpu_custom_call.1} parent=1 // pred_fallthru
      _
    // Predicated region
    $region14: #{tpu_custom_call.1} parent=1 // pred_check
      _
    $region15: #{tpu_custom_call.1} parent=1 // pred_check_branch
      %40 = sbr.rel (0) target = $region17
    $region16: #{tpu_custom_call.1} parent=1 // pred_region
      _
    $region17: #{tpu_custom_call.1} parent=1 // pred_fallthru
      _
    // Predicated region
    $region18: #{tpu_custom_call.1} parent=1 // pred_check
      _
    $region19: #{tpu_custom_call.1} parent=1 // pred_check_branch
      %42 = sbr.rel (0) target = $region21
    $region20: #{tpu_custom_call.1} parent=1 // pred_region
      _
    $region21: #{tpu_custom_call.1} parent=1 // pred_fallthru
      _
    // Predicated region
    $region22: #{tpu_custom_call.1} parent=1 // pred_check
      _
    $region23: #{tpu_custom_call.1} parent=1 // pred_check_branch
      %44 = sbr.rel (0) target = $region25
    $region24: #{tpu_custom_call.1} parent=1 // pred_region
      %45 = dma.done [#allocation4], 256
    $region25: #{tpu_custom_call.1} parent=1 // pred_fallthru
      _
    // Predicated region
    $region26: #{tpu_custom_call.1} parent=1 // pred_check
      _
    $region27: #{tpu_custom_call.1} parent=1 // pred_check_branch
      %47 = sbr.rel (0) target = $region29
    $region28: #{tpu_custom_call.1} parent=1 // pred_region
      %48 = dma.done [#allocation7], 1024
    $region29: #{tpu_custom_call.1} parent=1 // pred_fallthru
      _
    %p50 = scmp.eq.s32.totalorder 0, 0
    // Predicated region
    $region30: #{tpu_custom_call.1} parent=1 // pred_check
      %p51 = pneg %p50
    $region31: #{tpu_custom_call.1} parent=1 // pred_check_branch
      %53 = sbr.rel (%p51) target = $region33
    $region32: #{tpu_custom_call.1} parent=1 // pred_region
      %v54 = vld [vmem:[#allocation3] sm:$0xff]
      %v55 = vld [vmem:[#allocation3 + $0x8] sm:$0xff]
      %56 = vadd.xlane.f32.xlu0 %v54
      %v57 = vpop.xlane.xlu0 %56
      %58 = vadd.xlane.f32.xlu0 %v55
      %v59 = vpop.xlane.xlu0 %58
      %v60 = vrcp.pop 128.0
      %v61 = vmul.f32 %v57, %v60
      %v62 = vmul.f32 %v59, %v60
      %v63 = vsub.f32 %v54, %v61
      %v64 = vsub.f32 %v55, %v62
      %v65 = vmul.f32 %v63, %v63
      %v66 = vmul.f32 %v64, %v64
      %67 = vadd.xlane.f32.xlu0 %v65
      %v68 = vpop.xlane.xlu0 %67
      %69 = vadd.xlane.f32.xlu0 %v66
      %v70 = vpop.xlane.xlu0 %69
      %v71 = vmul.f32 %v68, 0.007874016
      %v72 = vmul.f32 %v70, 0.007874016
      %v73 = vrsqrt.pop %v71
      %v74 = vmul.f32 %v71, %v73
      %vm75 = vcmp.eq.f32.partialorder %v71, inf
      %v76 = vsel %vm75, %v71, %v74
      %vm77 = vcmp.eq.f32.partialorder %v71, 0.0
      %v78 = vand.u32 %v71, 2147483648
      %v79 = vsel %vm77, %v78, %v76
      %v80 = vrsqrt.pop %v72
      %v81 = vmul.f32 %v72, %v80
      %vm82 = vcmp.eq.f32.partialorder %v72, inf
      %v83 = vsel %vm82, %v72, %v81
      %vm84 = vcmp.eq.f32.partialorder %v72, 0.0
      %v85 = vand.u32 %v72, 2147483648
      %v86 = vsel %vm84, %v85, %v83
      %v87 = vld [vmem:[%s3] sm:$0x1]
      %v88 = vadd.f32 %v79, 1e-06
      %v89 = vadd.f32 %v86, 1e-06
      %v90 = vrcp.pop %v88
      %v91 = vmul.f32 %v63, %v90
      %v92 = vrcp.pop %v89
      %v93 = vmul.f32 %v64, %v92
      %v95 = vlaneseq
      %v96 = vshrl.u32 %v95, 7
      %v97 = vsub.s32 0, %v96
      %v98 = vrot.slane %v87, %v97
      %v100 = vmul.f32 %v98, %v91
      %v101 = vmul.f32 %v98, %v93
      %v102 = vld [vmem:[%s4] sm:$0x1]
      %v104 = vlaneseq
      %v105 = vshrl.u32 %v104, 7
      %v106 = vsub.s32 0, %v105
      %v107 = vrot.slane %v102, %v106
      %v109 = vadd.f32 %v100, %v107
      %v110 = vadd.f32 %v101, %v107
      %v111 = vpack.c.bf16 %v110, %v109
      %112 = vst [vmem:[#allocation2] sm:$0xff] %v111
    $region33: #{tpu_custom_call.1} parent=1 // pred_fallthru
      _
    %v113 = vld [vmem:[#allocation2] sm:$0xff]
    %v114 = vld [vmem:[#allocation6] sm:$0xf]
    %v115 = vld [vmem:[#allocation6 + $0x4] sm:$0xf]
    %v116 = vld [vmem:[#allocation6 + $0x8] sm:$0xf]
    %v117 = vld [vmem:[#allocation6 + $0xc] sm:$0xf]
    %v118 = vld [vmem:[#allocation6 + $0x10] sm:$0xf]
    %v119 = vld [vmem:[#allocation6 + $0x14] sm:$0xf]
    %v120 = vld [vmem:[#allocation6 + $0x18] sm:$0xf]
    %v121 = vld [vmem:[#allocation6 + $0x1c] sm:$0xf]
    %v122 = vld [vmem:[#allocation6 + $0x20] sm:$0xf]
    %v123 = vld [vmem:[#allocation6 + $0x24] sm:$0xf]
    %v124 = vld [vmem:[#allocation6 + $0x28] sm:$0xf]
    %v125 = vld [vmem:[#allocation6 + $0x2c] sm:$0xf]
    %v126 = vld [vmem:[#allocation6 + $0x30] sm:$0xf]
    %v127 = vld [vmem:[#allocation6 + $0x34] sm:$0xf]
    %v128 = vld [vmem:[#allocation6 + $0x38] sm:$0xf]
    %v129 = vld [vmem:[#allocation6 + $0x3c] sm:$0xf]
    %v130 = vld [vmem:[%s2] sm:$0x1]
    %v132 = vlaneseq
    %v133 = vshrl.u32 %v132, 7
    %v134 = vsub.s32 0, %v133
    %v135 = vrot.slane %v130, %v134
    %v153 = vunpack.c.l.b16 %v114
    %v154 = vunpack.c.l.b16 %v115
    %v155 = vunpack.c.l.b16 %v116
    %v156 = vunpack.c.l.b16 %v117
    %v157 = vunpack.c.l.b16 %v118
    %v158 = vunpack.c.l.b16 %v119
    %v159 = vunpack.c.l.b16 %v120
    %v160 = vunpack.c.l.b16 %v121
    %v161 = vunpack.c.l.b16 %v122
    %v162 = vunpack.c.l.b16 %v123
    %v163 = vunpack.c.l.b16 %v124
    %v164 = vunpack.c.l.b16 %v125
    %v165 = vunpack.c.l.b16 %v126
    %v166 = vunpack.c.l.b16 %v127
    %v167 = vunpack.c.l.b16 %v128
    %v168 = vunpack.c.l.b16 %v129
    %v169 = vpack.c.b16 %v154, %v153
    %v170 = vpack.c.b16 %v156, %v155
    %v171 = vpack.c.b16 %v158, %v157
    %v172 = vpack.c.b16 %v160, %v159
    %v173 = vpack.c.b16 %v162, %v161
    %v174 = vpack.c.b16 %v164, %v163
    %v175 = vpack.c.b16 %v166, %v165
    %v176 = vpack.c.b16 %v168, %v167
    %185 = vmatprep.subr.bf16.mxu0 0
    %186 = vmatpush1.bf16.msra.mxu0 %v169
    %187 = vmatprep.subr.bf16.mxu0 0
    %188 = vmatpush1.bf16.msra.mxu0 %v170
    %189 = vmatprep.subr.bf16.mxu0 0
    %190 = vmatpush1.bf16.msra.mxu0 %v171
    %191 = vmatprep.subr.bf16.mxu0 0
    %192 = vmatpush1.bf16.msra.mxu0 %v172
    %193 = vmatprep.subr.bf16.mxu0 0
    %194 = vmatpush1.bf16.msra.mxu0 %v173
    %195 = vmatprep.subr.bf16.mxu0 0
    %196 = vmatpush1.bf16.msra.mxu0 %v174
    %197 = vmatprep.subr.bf16.mxu0 0
    %198 = vmatpush1.bf16.msra.mxu0 %v175
    %199 = vmatprep.subr.bf16.mxu0 0
    %200 = vmatpush1.bf16.msra.mxu0 %v176
    %201 = vmatprep.subr.bf16.mxu0 0
    %202 = vmatpush1.bf16.msra.mxu0 0
    %203 = vmatprep.subr.bf16.mxu0 0
    %204 = vmatpush1.bf16.msra.mxu0 0
    %205 = vmatprep.subr.bf16.mxu0 0
    %206 = vmatpush1.bf16.msra.mxu0 0
    %207 = vmatprep.subr.bf16.mxu0 0
    %208 = vmatpush1.bf16.msra.mxu0 0
    %209 = vmatprep.subr.bf16.mxu0 0
    %210 = vmatpush1.bf16.msra.mxu0 0
    %211 = vmatprep.subr.bf16.mxu0 0
    %212 = vmatpush1.bf16.msra.mxu0 0
    %213 = vmatprep.subr.bf16.mxu0 0
    %214 = vmatpush1.bf16.msra.mxu0 0
    %215 = vmatprep.subr.bf16.mxu0 0
    %216 = vmatpush1.bf16.msra.mxu0 0
    %217 = vmatprep.mubr.bf16.mxu0 0
    %218 = vmatmul.mubr.bf16.gmra.mrb[0].mxu0 %v113
    %v219 = vpop.f32.mrb[0].mxu0
    %v220 = vadd.f32 %v135, %v219
    %v221 = vpop.f32.mrb[0].mxu0
    %v222 = vpop.f32.mrb[0].mxu0
    %v223 = vadd.f32 %v135, %v222
    %v224 = vpop.f32.mrb[0].mxu0
    %225 = vdwg.mxu0
    %s226 = smul.u32 0, 128
    %s227 = sshra.s32 %s226, 7
    %s228 = sand.u32 %s226, 127
    %s229 = scalar_lea.vmem [#allocation3], %s227
    %v230 = vld [vmem:[%s229] sm:$0xff]
    %v231 = vld [vmem:[%s229 + $0x8] sm:$0xff]
    %v232 = vadd.f32 %v230, %v220
    %v233 = vadd.f32 %v231, %v223
    %234 = vst [vmem:[#allocation8] sm:$0xff] %v232
    %235 = vst [vmem:[#allocation8 + $0x8] sm:$0xff] %v233
    // Predicated region
    $region34: #{tpu_custom_call.1} parent=1 // pred_check
      _
    $region35: #{tpu_custom_call.1} parent=1 // pred_check_branch
      %237 = sbr.rel (0) target = $region37
    $region36: #{tpu_custom_call.1} parent=1 // pred_region
      %s239 = ssub.s32 256, 256
      %240 = vsyncadd [#allocation5], %s239
      %s241 = sshll.u32 [#allocation8], 4
      %s242 = int_to_ptr.vmem [resolvable:$true] %s241
      %247 = dma.vmem_to_hbm [thread:$0]  %s242, 256, %s5, [#allocation5], 128, 128, 8
    $region37: #{tpu_custom_call.1} parent=1 // pred_fallthru
      _
    // Predicated region
    $region38: #{tpu_custom_call.1} parent=1 // pred_check
      _
    $region39: #{tpu_custom_call.1} parent=1 // pred_check_branch
      %249 = sbr.rel (0) target = $region41
    $region40: #{tpu_custom_call.1} parent=1 // pred_region
      %250 = dma.done [#allocation5], 256
    $region41: #{tpu_custom_call.1} parent=1 // pred_fallthru
      _
    %251 = vsyncpa [#allocation4], 1
    %252 = vsyncpa [#allocation7], 1
    %253 = vsyncpa [#allocation5], 1

</llo_original>
